<compile_context>
chip_gen: v7x
topology: tpu7x:2x2x1
jax: 0.10.0
libtpu: 0.0.40
codegen_flags: <defaults>
</compile_context>

<pallas_src>
import functools

import jax
import jax.numpy as jnp
from jax.experimental import pallas as pl
from jax.experimental.pallas import tpu as pltpu


def _grn_kernel(x_ref, gamma_ref, beta_ref, o_ref, *, eps):
    # x_ref: (1, C, HW) block for one batch element, native dtype.
    x = x_ref[...]

    # Sum of squares over spatial (lane axis), accumulated in f32 without
    # keeping an f32 copy of the whole tile live.
    sq = jnp.sum(x * x, axis=2, keepdims=True, dtype=jnp.float32)   # (1, C, 1)
    gx = jnp.sqrt(sq)                                               # (1, C, 1)

    # Channel mean (sublane/XLU reduction) + EUP approximate reciprocal.
    mean_gx = jnp.mean(gx, axis=1, keepdims=True)                   # (1, 1, 1)
    denom = mean_gx + eps
    r = pl.reciprocal(denom, approx=True)
    # One Newton step on a single (1,1,1) value: restores ~f32 accuracy for
    # negligible cost while keeping the divide off the VPU critical slot.
    r = r * (2.0 - denom * r)
    nx = gx * r                                                     # (1, C, 1)

    gamma = gamma_ref[...].astype(jnp.float32)                      # (C, 1)
    beta = beta_ref[...]                                            # (C, 1)

    # Pre-fold the per-channel scale so the big apply is one FMA per element.
    scale = (1.0 + gamma * nx).astype(x.dtype)                      # (1, C, 1)
    o_ref[...] = (x * scale + beta.astype(x.dtype)).astype(o_ref.dtype)


def grn_pallas(x_nchw, gamma, beta, eps=1e-6):
    """x_nchw: (N, C, H, W); gamma/beta: (1, C, 1, 1). Returns (N, C, H, W)."""
    N, C, H, W = x_nchw.shape
    HW = H * W

    # Free reshapes — no HBM traffic, layout stays C-major with HW on lanes.
    x = x_nchw.reshape(N, C, HW)
    g = gamma.reshape(C, 1)
    b = beta.reshape(C, 1)

    itemsize = jnp.dtype(x_nchw.dtype).itemsize
    block_bytes = C * HW * itemsize
    # Double-buffered in + out plus f32 reduction intermediates, with
    # headroom; clamped so it also fits v7x's smaller (64 MiB) VMEM.
    vmem_limit = int(min(100 * 2**20, max(32 * 2**20, 8 * block_bytes)))

    cost = pl.CostEstimate(
        flops=4 * N * C * HW,                    # x*x + reduce, then FMA apply
        transcendentals=N * (C + 1),             # sqrt per (n, c) + recip per n
        bytes_accessed=2 * N * C * HW * itemsize + 2 * C * 4,
    )

    kernel = functools.partial(_grn_kernel, eps=eps)

    out = pl.pallas_call(
        kernel,
        out_shape=jax.ShapeDtypeStruct((N, C, HW), x_nchw.dtype),
        grid_spec=pltpu.PrefetchScalarGridSpec(
            num_scalar_prefetch=0,
            grid=(N,),
            in_specs=[
                pl.BlockSpec((1, C, HW), lambda n: (n, 0, 0)),
                pl.BlockSpec((C, 1), lambda n: (0, 0)),
                pl.BlockSpec((C, 1), lambda n: (0, 0)),
            ],
            out_specs=pl.BlockSpec((1, C, HW), lambda n: (n, 0, 0)),
        ),
        compiler_params=pltpu.CompilerParams(
            dimension_semantics=("parallel",),
            vmem_limit_bytes=vmem_limit,
        ),
        cost_estimate=cost,
    )(x, g, b)

    # TODO(synk): for very large H*W with wide C on v7x (64 MiB VMEM), switch
    # to a two-pass HW-tiled variant (pass 1 accumulates per-channel sum of
    # squares, pass 2 applies the normalization with both grid axes parallel).
    return out.reshape(N, C, H, W)


def grn_reference(x, gamma, beta, eps=1e-6):
    """Plain-JAX reference matching the PyTorch forward (NCHW), f32 math."""
    xf = x.astype(jnp.float32)
    gx = jnp.sqrt(jnp.sum(xf * xf, axis=(2, 3), keepdims=True))
    nx = gx / (jnp.mean(gx, axis=1, keepdims=True) + eps)
    out = (1.0 + gamma.astype(jnp.float32) * nx) * xf + beta.astype(jnp.float32)
    return out.astype(x.dtype)


if __name__ == "__main__":
    key = jax.random.PRNGKey(0)
    kx, kg, kb = jax.random.split(key, 3)

    N, C, H, W = 2, 4, 16, 16
    x = jax.random.normal(kx, (N, C, H, W), dtype=jnp.float32)
    # nn.Parameter shapes (1, dim, 1, 1); deterministic nonzero values to
    # exercise the affine path (the module __init__ uses zeros).
    gamma = 0.1 * jax.random.normal(kg, (1, C, 1, 1), dtype=jnp.float32)
    beta = 0.1 * jax.random.normal(kb, (1, C, 1, 1), dtype=jnp.float32)

    # f32 path.
    out = jax.block_until_ready(grn_pallas(x, gamma, beta))
    ref = grn_reference(x, gamma, beta)
    assert out.shape == (N, C, H, W)
    assert jnp.allclose(out, ref, atol=1e-4, rtol=1e-4), "f32 mismatch vs reference"

    # bf16 path (native-dtype apply on v6e/v7x; f32 accumulation for the norm).
    x_bf16 = x.astype(jnp.bfloat16)
    out_bf16 = jax.block_until_ready(grn_pallas(x_bf16, gamma, beta))
    ref_bf16 = grn_reference(x, gamma, beta).astype(jnp.bfloat16)
    assert out_bf16.dtype == jnp.bfloat16
    assert jnp.allclose(out_bf16.astype(jnp.float32),
                        ref_bf16.astype(jnp.float32),
                        atol=5e-2, rtol=5e-2), "bf16 mismatch vs reference"

    print("KERNEL_OK")
</pallas_src>

<mosaic_0001>
module attributes {stable_mosaic.version = 11 : i64} {
  func.func @_grn_kernel(%arg0: i32, %arg1: memref<1x4x256xf32, #tpu.memory_space<vmem>>, %arg2: memref<4x1xf32, #tpu.memory_space<vmem>>, %arg3: memref<4x1xf32, #tpu.memory_space<vmem>>, %arg4: memref<1x4x256xf32, #tpu.memory_space<vmem>>) attributes {dimension_semantics = [#tpu.dimension_semantics<parallel>], iteration_bounds = array<i64: 2>, scalar_prefetch = 0 : i64, scratch_operands = 0 : i64, tpu.core_type = #tpu.core_type<tc>, window_params = [{transform_indices = @transform_0, window_bounds = array<i64: 1, 4, 256>}, {pipeline_mode = #tpu.pipeline_mode<synchronous>, transform_indices = @transform_1, window_bounds = array<i64: 4, 1>}, {pipeline_mode = #tpu.pipeline_mode<synchronous>, transform_indices = @transform_2, window_bounds = array<i64: 4, 1>}, {transform_indices = @transform_3, window_bounds = array<i64: 1, 4, 256>}]} {
    %c0 = arith.constant 0 : index
    %c0_0 = arith.constant 0 : index
    %c0_1 = arith.constant 0 : index
    %0 = vector.load %arg1[%c0, %c0_0, %c0_1] : memref<1x4x256xf32, #tpu.memory_space<vmem>>, vector<1x4x256xf32>
    %1 = arith.mulf %0, %0 : vector<1x4x256xf32>
    %cst = arith.constant dense<0.000000e+00> : vector<1x4xf32>
    %2 = vector.multi_reduction <add>, %1, %cst [2] : vector<1x4x256xf32> to vector<1x4xf32>
    %3 = vector.shape_cast %2 : vector<1x4xf32> to vector<1x4x1xf32>
    %4 = math.sqrt %3 : vector<1x4x1xf32>
    %cst_2 = arith.constant dense<0.000000e+00> : vector<1x1xf32>
    %5 = vector.multi_reduction <add>, %4, %cst_2 [1] : vector<1x4x1xf32> to vector<1x1xf32>
    %6 = vector.shape_cast %5 : vector<1x1xf32> to vector<1x1x1xf32>
    %cst_3 = arith.constant 4.000000e+00 : f32
    %7 = vector.broadcast %cst_3 : f32 to vector<1x1x1xf32>
    %8 = arith.divf %6, %7 : vector<1x1x1xf32>
    %cst_4 = arith.constant 9.99999997E-7 : f32
    %9 = vector.broadcast %cst_4 : f32 to vector<1x1x1xf32>
    %10 = arith.addf %8, %9 : vector<1x1x1xf32>
    %11 = tpu.reciprocal %10 {approx = true} : vector<1x1x1xf32> -> vector<1x1x1xf32>
    %12 = arith.mulf %10, %11 : vector<1x1x1xf32>
    %cst_5 = arith.constant 2.000000e+00 : f32
    %13 = vector.broadcast %cst_5 : f32 to vector<1x1x1xf32>
    %14 = arith.subf %13, %12 : vector<1x1x1xf32>
    %15 = arith.mulf %11, %14 : vector<1x1x1xf32>
    %16 = vector.broadcast %15 : vector<1x1x1xf32> to vector<1x4x1xf32>
    %17 = arith.mulf %4, %16 : vector<1x4x1xf32>
    %c0_6 = arith.constant 0 : index
    %c0_7 = arith.constant 0 : index
    %18 = vector.load %arg2[%c0_6, %c0_7] : memref<4x1xf32, #tpu.memory_space<vmem>>, vector<4x1xf32>
    %c0_8 = arith.constant 0 : index
    %c0_9 = arith.constant 0 : index
    %19 = vector.load %arg3[%c0_8, %c0_9] : memref<4x1xf32, #tpu.memory_space<vmem>>, vector<4x1xf32>
    %20 = vector.shape_cast %18 : vector<4x1xf32> to vector<1x4x1xf32>
    %21 = arith.mulf %20, %17 : vector<1x4x1xf32>
    %cst_10 = arith.constant 1.000000e+00 : f32
    %22 = vector.broadcast %cst_10 : f32 to vector<1x4x1xf32>
    %23 = arith.addf %22, %21 : vector<1x4x1xf32>
    %24 = vector.broadcast %23 : vector<1x4x1xf32> to vector<1x4x256xf32>
    %25 = arith.mulf %0, %24 : vector<1x4x256xf32>
    %26 = vector.shape_cast %19 : vector<4x1xf32> to vector<1x4x1xf32>
    %27 = vector.broadcast %26 : vector<1x4x1xf32> to vector<1x4x256xf32>
    %28 = arith.addf %25, %27 : vector<1x4x256xf32>
    %c0_11 = arith.constant 0 : index
    %c0_12 = arith.constant 0 : index
    %c0_13 = arith.constant 0 : index
    %29 = vector.load %arg4[%c0_11, %c0_12, %c0_13] : memref<1x4x256xf32, #tpu.memory_space<vmem>>, vector<1x4x256xf32>
    tpu.vector_store %arg4[%c0_11, %c0_12, %c0_13], %28 {strides = array<i32>} : memref<1x4x256xf32, #tpu.memory_space<vmem>>, vector<1x4x256xf32>,
    return
  }
  func.func @transform_0(%arg0: i32) -> (i32, i32, i32) {
    %c0_i32 = arith.constant 0 : i32
    %c0_i32_0 = arith.constant 0 : i32
    %c0_i32_1 = arith.constant 0 : i32
    return %arg0, %c0_i32, %c0_i32_0 : i32, i32, i32
  }
  func.func @transform_1(%arg0: i32) -> (i32, i32) {
    %c0_i32 = arith.constant 0 : i32
    %c0_i32_0 = arith.constant 0 : i32
    %c0_i32_1 = arith.constant 0 : i32
    return %c0_i32, %c0_i32_0 : i32, i32
  }
  func.func @transform_2(%arg0: i32) -> (i32, i32) {
    %c0_i32 = arith.constant 0 : i32
    %c0_i32_0 = arith.constant 0 : i32
    %c0_i32_1 = arith.constant 0 : i32
    return %c0_i32, %c0_i32_0 : i32, i32
  }
  func.func @transform_3(%arg0: i32) -> (i32, i32, i32) {
    %c0_i32 = arith.constant 0 : i32
    %c0_i32_0 = arith.constant 0 : i32
    %c0_i32_1 = arith.constant 0 : i32
    return %arg0, %c0_i32, %c0_i32_0 : i32, i32, i32
  }
}

</mosaic_0001>

<llo_original>
// kernel: tpu_custom_call.1
$region0: #{tpu_custom_call.1}
  #allocation0 [shape = 'u32[]', space=smem, size = 0x4, offset = 0x4, fixed_abs, tag = 'smem constant byte address 0x4 - core index']
  #allocation1 [shape = 'u32[144,128]{1,0:T(1,128)}', space=vmem, size = 0x12000, scoped, tag = 'internal scratch']
  %s0 = inlined_call_operand.hbm [shape: f32[2,4,256], index: 0, kind: input, shape index: {}]
  %s1 = inlined_call_operand.vmem [shape: f32[4,1], index: 1, kind: input, shape index: {}]
  %s2 = inlined_call_operand.vmem [shape: f32[4,1], index: 2, kind: input, shape index: {}]
  %s3 = inlined_call_operand.hbm [shape: f32[2,4,256], index: 3, kind: output, shape index: {}]
  %s4 = sld [smem:[#allocation0]]
  $region49: #{tpu_custom_call.1} parent=0
    _
  %s6 = ssub.s32 1, %s4
  %s7 = scalar_select 0, %s6, %s4
  $region1: #{tpu_custom_call.1} parent=0
    #allocation2 [shape = 'u8[8192]{0}', space=vmem, size = 0x2000, scoped, tag = 'input window, operand 0']
    #allocation3 [shape = 's32[2]{0}', space=sflag, size = 0x8, scoped, tag = 'scoped memory for tpu_custom_call.1']
    #allocation4 [shape = 's32[2]{0}', space=sflag, size = 0x8, scoped, tag = 'scoped memory for tpu_custom_call.1']
    #allocation5 [shape = 'u8[8192]{0}', space=vmem, size = 0x2000, scoped, tag = 'output window, operand 0']
    %8 = vsyncpa [#allocation3], 0
    %s9 = scalar_lea.sflag [#allocation3], 1
    %10 = vsyncpa %s9, 0
    %11 = vsyncpa [#allocation4], 0
    %s12 = scalar_lea.sflag [#allocation4], 1
    %13 = vsyncpa %s12, 0
    loop: start=0, step=1, limit=4
    $region2: #{tpu_custom_call.1} parent=1 // loop_pre_header
      _
    $region3: #{tpu_custom_call.1} parent=1 // loop_header
      %s15 = sphi 0, %s19
      %p16 = scmp.ge.s32.totalorder %s15, 4
      %s25 = sphi 0, %s27
      %s28 = sphi 0, %s25
      %s29 = sphi 0, %s28
      %s45 = sphi 0, %s29
      %s49 = sphi 0, %s49
      %s51 = sphi 0, %s49
      %s52 = sphi 0, %s51
      %s66 = sphi 0, %s52
      %s70 = sphi 0, %s70
      %s72 = sphi 0, %s70
      %s73 = sphi 0, %s72
      %s87 = sphi 0, %s73
      %s93 = sphi 0, %s95
      %s96 = sphi 0, %s93
      %s97 = sphi 0, %s96
      %s113 = sphi 0, %s97
    $region4: #{tpu_custom_call.1} parent=1 // loop_header_branch
      %18 = sbr.rel (%p16) target = $region8
    $region5: #{tpu_custom_call.1} parent=1 // loop_body
      %s20 = ssub.s32 %s15, 1
      %s21 = ssub.s32 %s15, 2
      %s22 = sadd.s32 %s15, 1
      %s23 = ssub.s32 %s15, %s22
      %p24 = scmp.eq.s32.totalorder %s23, 0
      %s26 = sadd.s32 %s25, 1
      %s27 = scalar_select %p24, %s25, %s26
      %p30 = pneg %p24
      %p31 = scmp.eq.s32.totalorder %s15, 1
      %p32 = por %p30, %p31
      %p33 = scmp.ne.s32.totalorder %s25, %s28
      %p34 = scmp.eq.s32.totalorder %s15, 0
      %p35 = por %p33, %p34
      %p36 = scmp.ne.s32.totalorder %s25, %s28
      %p37 = scmp.eq.s32.totalorder %s20, 1
      %p38 = por %p36, %p37
      %p39 = scmp.ne.s32.totalorder %s28, %s29
      %p40 = scmp.eq.s32.totalorder %s20, 0
      %p41 = por %p39, %p40
      %p42 = scmp.ne.s32.totalorder %s28, %s29
      %p43 = scmp.eq.s32.totalorder %s21, 1
      %p44 = por %p42, %p43
      %p46 = scmp.ne.s32.totalorder %s29, %s45
      %p47 = scmp.eq.s32.totalorder %s21, 0
      %p48 = por %p46, %p47
      %s50 = sadd.s32 %s49, 1
      %p53 = scmp.eq.s32.totalorder %s15, 1
      %p54 = scmp.ne.s32.totalorder %s49, %s51
      %p55 = scmp.eq.s32.totalorder %s15, 0
      %p56 = por %p54, %p55
      %p57 = scmp.ne.s32.totalorder %s49, %s51
      %p58 = scmp.eq.s32.totalorder %s20, 1
      %p59 = por %p57, %p58
      %p60 = scmp.ne.s32.totalorder %s51, %s52
      %p61 = scmp.eq.s32.totalorder %s20, 0
      %p62 = por %p60, %p61
      %p63 = scmp.ne.s32.totalorder %s51, %s52
      %p64 = scmp.eq.s32.totalorder %s21, 1
      %p65 = por %p63, %p64
      %p67 = scmp.ne.s32.totalorder %s52, %s66
      %p68 = scmp.eq.s32.totalorder %s21, 0
      %p69 = por %p67, %p68
      %s71 = sadd.s32 %s70, 1
      %p74 = scmp.eq.s32.totalorder %s15, 1
      %p75 = scmp.ne.s32.totalorder %s70, %s72
      %p76 = scmp.eq.s32.totalorder %s15, 0
      %p77 = por %p75, %p76
      %p78 = scmp.ne.s32.totalorder %s70, %s72
      %p79 = scmp.eq.s32.totalorder %s20, 1
      %p80 = por %p78, %p79
      %p81 = scmp.ne.s32.totalorder %s72, %s73
      %p82 = scmp.eq.s32.totalorder %s20, 0
      %p83 = por %p81, %p82
      %p84 = scmp.ne.s32.totalorder %s72, %s73
      %p85 = scmp.eq.s32.totalorder %s21, 1
      %p86 = por %p84, %p85
      %p88 = scmp.ne.s32.totalorder %s73, %s87
      %p89 = scmp.eq.s32.totalorder %s21, 0
      %p90 = por %p88, %p89
      %s91 = ssub.s32 %s15, %s22
      %p92 = scmp.eq.s32.totalorder %s91, 0
      %s94 = sadd.s32 %s93, 1
      %s95 = scalar_select %p92, %s93, %s94
      %p98 = pneg %p92
      %p99 = scmp.eq.s32.totalorder %s15, 1
      %p100 = por %p98, %p99
      %p101 = scmp.ne.s32.totalorder %s93, %s96
      %p102 = scmp.eq.s32.totalorder %s15, 0
      %p103 = por %p101, %p102
      %p104 = scmp.ne.s32.totalorder %s93, %s96
      %p105 = scmp.eq.s32.totalorder %s20, 1
      %p106 = por %p104, %p105
      %p107 = scmp.ne.s32.totalorder %s96, %s97
      %p108 = scmp.eq.s32.totalorder %s20, 0
      %p109 = por %p107, %p108
      %p110 = scmp.ne.s32.totalorder %s96, %s97
      %p111 = scmp.eq.s32.totalorder %s21, 1
      %p112 = por %p110, %p111
      %p114 = scmp.ne.s32.totalorder %s97, %s113
      %p115 = scmp.eq.s32.totalorder %s21, 0
      %p116 = por %p114, %p115
      %p117 = scmp.le.s32.totalorder 1, %s15
      %p118 = scmp.lt.s32.totalorder %s15, 3
      %p119 = pnand %p117, %p118
      %p120 = pneg %p119
      // Predicated region
      $region9: #{tpu_custom_call.1} parent=5 // pred_check
        _
      $region10: #{tpu_custom_call.1} parent=5 // pred_check_branch
        %122 = sbr.rel (%p119) target = $region12
      $region11: #{tpu_custom_call.1} parent=5 // pred_region
        %s123 = ssub.s32 %s15, 1
        // Predicated region
        $region13: #{tpu_custom_call.1} parent=11 // pred_check
          %p124 = pneg %p62
        $region14: #{tpu_custom_call.1} parent=11 // pred_check_branch
          %126 = sbr.rel (%p124) target = $region16
        $region15: #{tpu_custom_call.1} parent=11 // pred_region
          _
        $region16: #{tpu_custom_call.1} parent=11 // pred_fallthru
          _
        // Predicated region
        $region17: #{tpu_custom_call.1} parent=11 // pred_check
          %p127 = pneg %p83
        $region18: #{tpu_custom_call.1} parent=11 // pred_check_branch
          %129 = sbr.rel (%p127) target = $region20
        $region19: #{tpu_custom_call.1} parent=11 // pred_region
          _
        $region20: #{tpu_custom_call.1} parent=11 // pred_fallthru
          _
      $region12: #{tpu_custom_call.1} parent=5 // pred_fallthru
        _
      %p130 = scmp.lt.s32.totalorder %s15, 2
      // Predicated region
      $region21: #{tpu_custom_call.1} parent=5 // pred_check
        %p131 = pneg %p130
      $region22: #{tpu_custom_call.1} parent=5 // pred_check_branch
        %133 = sbr.rel (%p131) target = $region24
      $region23: #{tpu_custom_call.1} parent=5 // pred_region
        // Predicated region
        $region25: #{tpu_custom_call.1} parent=23 // pred_check
          %p134 = pneg %p35
        $region26: #{tpu_custom_call.1} parent=23 // pred_check_branch
          %136 = sbr.rel (%p134) target = $region28
        $region27: #{tpu_custom_call.1} parent=23 // pred_region
          %s137 = sand.u32 %s25, 1
          %s138 = scalar_lea.sflag [#allocation3], %s137
          %s139 = sand.u32 %s25, 1
          %s140 = smul.addr %s139, 8
          %s141 = scalar_lea.vmem [#allocation2], %s140
          %s143 = ssub.s32 128, 128
          %144 = vsyncadd %s138, %s143
          %s145 = smul.addr %s15, 2
          %s146 = smul.addr %s145, 64
          %s147 = scalar_lea.hbm %s0, %s146
          %s149 = sshll.u32 %s141, 4
          %s150 = int_to_ptr.vmem [resolvable:$true] %s149
          %152 = dma.hbm_to_vmem [thread:$0]  %s147, 128, %s150, %s138
        $region28: #{tpu_custom_call.1} parent=23 // pred_fallthru
          _
      $region24: #{tpu_custom_call.1} parent=5 // pred_fallthru
        _
      %p153 = scmp.le.s32.totalorder 1, %s15
      %p154 = scmp.lt.s32.totalorder %s15, 3
      %p155 = pnand %p153, %p154
      %p156 = pneg %p155
      // Predicated region
      $region29: #{tpu_custom_call.1} parent=5 // pred_check
        _
      $region30: #{tpu_custom_call.1} parent=5 // pred_check_branch
        %158 = sbr.rel (%p155) target = $region32
      $region31: #{tpu_custom_call.1} parent=5 // pred_region
        %s159 = ssub.s32 %s15, 1
        %s160 = sand.u32 %s28, 1
        %s161 = scalar_lea.sflag [#allocation3], %s160
        %s162 = sand.u32 %s28, 1
        %s163 = smul.addr %s162, 8
        %s164 = scalar_lea.vmem [#allocation2], %s163
        // Predicated region
        $region33: #{tpu_custom_call.1} parent=31 // pred_check
          %p165 = pneg %p41
        $region34: #{tpu_custom_call.1} parent=31 // pred_check_branch
          %167 = sbr.rel (%p165) target = $region36
        $region35: #{tpu_custom_call.1} parent=31 // pred_region
          %168 = dma.done %s161, 128
        $region36: #{tpu_custom_call.1} parent=31 // pred_fallthru
          _
        %s169 = sand.u32 %s28, 1
        %s170 = scalar_lea.sflag [#allocation3], %s169
        %s171 = sand.u32 %s28, 1
        %s172 = smul.addr %s171, 8
        %s173 = scalar_lea.vmem [#allocation2], %s172
        %p174 = pneg %p41
        %p175 = pneg %p38
        %p176 = pneg %p62
        %p177 = pneg %p59
        %p178 = pneg %p83
        %p179 = pneg %p80
        %p180 = pneg %p109
        %p181 = pneg %p106
        %s182 = sand.u32 %s96, 1
        %s183 = scalar_lea.sflag [#allocation4], %s182
        %s184 = sand.u32 %s96, 1
        %s185 = smul.addr %s184, 8
        %s186 = scalar_lea.vmem [#allocation5], %s185
        %v187 = vld [vmem:[%s164] sm:$0xff]
        %v188 = vmul.f32 %v187, %v187
        %v190 = vcombine.high %v188, %v188
        %vm192 = vcmask 1043456
        %v193 = vsel %vm192, %v188, 0.0
        %v194 = vsel %vm192, %v190, 0.0
        %v195 = vadd.f32 %v193, %v194
        %196 = vadd.xlane.f32.xlu0 %v195
        %v197 = vpop.xlane.xlu0 %196
        %v198 = vrsqrt.pop %v197
        %v199 = vmul.f32 %v197, %v198
        %vm200 = vcmp.eq.f32.partialorder %v197, inf
        %v201 = vsel %vm200, %v197, %v199
        %vm202 = vcmp.eq.f32.partialorder %v197, 0.0
        %v203 = vand.u32 %v197, 2147483648
        %v204 = vsel %vm202, %v203, %v201
        %v205 = vsel %vm192, %v204, 0.0
        %v206 = vrot.slane %v205, 4
        %v207 = vadd.f32 %v205, %v206
        %v208 = vrot.slane %v207, 2
        %v209 = vadd.f32 %v207, %v208
        %v210 = vrot.slane %v209, 1
        %v211 = vadd.f32 %v209, %v210
        %v212 = vrcp.pop 4.0
        %v213 = vmul.f32 %v211, %v212
        %v214 = vadd.f32 %v213, 1e-06
        %v215 = vrcp.pop %v214
        %v216 = vmul.f32 %v214, %v215
        %v217 = vsub.f32 2.0, %v216
        %v218 = vmul.f32 %v215, %v217
        %v219 = vmul.f32 %v204, %v218
        %v220 = vld [vmem:[%s1] sm:$0xf]
        %v221 = vld [vmem:[%s2] sm:$0xf]
        %v222 = vmul.f32 %v220, %v219
        %v223 = vadd.f32 %v222, 1.0
        %225 = vset.pattern.permute.xlu0 0
        %226 = vperm.xlu0 %225, %v223
        %v227 = vpop.permute.xlu0 %226
        %v229 = vunpack.c.l.s4 839922192
        %v230 = vunpack.c.0.s8 %v229
        %v231 = vlaneseq
        %v232 = vshrl.u32 %v231, 7
        %v233 = vsub.s32 %v230, %v232
        %v234 = vrot.slane %v227, %v233
        %v236 = vmul.f32 %v187, %v234
        %238 = vset.pattern.permute.xlu0 0
        %239 = vperm.xlu0 %238, %v221
        %v240 = vpop.permute.xlu0 %239
        %v242 = vunpack.c.l.s4 839922192
        %v243 = vunpack.c.0.s8 %v242
        %v244 = vlaneseq
        %v245 = vshrl.u32 %v244, 7
        %v246 = vsub.s32 %v243, %v245
        %v247 = vrot.slane %v240, %v246
        %v249 = vadd.f32 %v236, %v247
        %250 = vst [vmem:[%s186] sm:$0xff] %v249
        %s251 = sand.u32 %s96, 1
        %s252 = scalar_lea.sflag [#allocation4], %s251
        %s253 = sand.u32 %s96, 1
        %s254 = smul.addr %s253, 8
        %s255 = scalar_lea.vmem [#allocation5], %s254
        // Predicated region
        $region37: #{tpu_custom_call.1} parent=31 // pred_check
          %p256 = pneg %p106
        $region38: #{tpu_custom_call.1} parent=31 // pred_check_branch
          %258 = sbr.rel (%p256) target = $region40
        $region39: #{tpu_custom_call.1} parent=31 // pred_region
          %s260 = ssub.s32 128, 128
          %261 = vsyncadd %s252, %s260
          %s262 = smul.addr %s20, 2
          %s263 = smul.addr %s262, 64
          %s264 = scalar_lea.hbm %s3, %s263
          %s266 = sshll.u32 %s255, 4
          %s267 = int_to_ptr.vmem [resolvable:$true] %s266
          %269 = dma.vmem_to_hbm [thread:$0]  %s267, 128, %s264, %s252
        $region40: #{tpu_custom_call.1} parent=31 // pred_fallthru
          _
      $region32: #{tpu_custom_call.1} parent=5 // pred_fallthru
        _
      %p270 = scmp.le.s32.totalorder 2, %s15
      // Predicated region
      $region41: #{tpu_custom_call.1} parent=5 // pred_check
        %p271 = pneg %p270
      $region42: #{tpu_custom_call.1} parent=5 // pred_check_branch
        %273 = sbr.rel (%p271) target = $region44
      $region43: #{tpu_custom_call.1} parent=5 // pred_region
        %s274 = ssub.s32 %s15, 2
        // Predicated region
        $region45: #{tpu_custom_call.1} parent=43 // pred_check
          %p275 = pneg %p112
        $region46: #{tpu_custom_call.1} parent=43 // pred_check_branch
          %277 = sbr.rel (%p275) target = $region48
        $region47: #{tpu_custom_call.1} parent=43 // pred_region
          %s278 = sand.u32 %s97, 1
          %s279 = scalar_lea.sflag [#allocation4], %s278
          %s280 = sand.u32 %s97, 1
          %s281 = smul.addr %s280, 8
          %s282 = scalar_lea.vmem [#allocation5], %s281
          %283 = dma.done %s279, 128
        $region48: #{tpu_custom_call.1} parent=43 // pred_fallthru
          _
      $region44: #{tpu_custom_call.1} parent=5 // pred_fallthru
        _
    $region6: #{tpu_custom_call.1} parent=1 // loop_footer
      %s19 = sadd.s32 1, %s15
    $region7: #{tpu_custom_call.1} parent=1 // loop_footer_branch
      %14 = sbr.rel target = $region3
    $region8: #{tpu_custom_call.1} parent=1 // loop_exit
      _
    %284 = vsyncpa [#allocation3], 1
    %s285 = scalar_lea.sflag [#allocation3], 1
    %286 = vsyncpa %s285, 1
    %287 = vsyncpa [#allocation4], 1
    %s288 = scalar_lea.sflag [#allocation4], 1
    %289 = vsyncpa %s288, 1

</llo_original>
